<compile_context>
chip_gen: v6e
topology: v6e:2x2x1
jax: 0.10.0
libtpu: 0.0.40
codegen_flags: <defaults>
</compile_context>

<pallas_src>
import math
import functools

import jax
import jax.numpy as jnp
from jax.experimental import pallas as pl
from jax.experimental.pallas import tpu as pltpu

MAX_LANE_WIDTH = 512          # lane dim: multiple of 128 -> unmasked full-lane vst
MAX_BLOCK_BYTES = 4 << 20     # 4 MiB blocks; (2 in + 2 out) buffers = 16 MiB VMEM
VMEM_LIMIT_BYTES = 32 << 20   # safe scoped-VMEM limit on v5e/v6e/v7x


def _scaled_leaky_relu_kernel(x_ref, o_ref, *, pos_coeff, neg_coeff):
    x = x_ref[...]
    # sqrt(2) folded into both branches: single select, scale already applied.
    o_ref[...] = jnp.where(x >= 0, x * pos_coeff, x * neg_coeff)


def _round_up(a, b):
    return a + (-a) % b


def _pick_lane_width(n):
    """Largest multiple-of-128 divisor of n (<= MAX_LANE_WIDTH); None if ragged."""
    for lane in (512, 384, 256, 128):
        if n % lane == 0:
            return lane
    return None


def scaled_leaky_relu(x, negative_slope=0.2):
    """Elementwise leaky_relu(x, negative_slope) * sqrt(2), any shape/dtype."""
    orig_shape = x.shape
    dtype = x.dtype
    n = x.size
    itemsize = jnp.dtype(dtype).itemsize
    sublane = max(8, 32 // itemsize)          # 8 f32, 16 bf16, 32 int8/fp8

    lane = _pick_lane_width(n)
    padded = lane is None
    if padded:
        # Fallback for ragged sizes: minimal tail pad (<128 elems), sliced off
        # afterwards.  Typical NCHW activations never hit this path.
        lane = 128
        rows = pl.cdiv(n, lane)
        flat = jnp.pad(x.reshape(-1), (0, rows * lane - n))
    else:
        rows = n // lane                       # exact reshape: no pad, no slice
        flat = x.reshape(-1)
    x2d = flat.reshape(rows, lane)

    # Block rows: large (<= MAX_BLOCK_BYTES) blocks, dtype-aware sublane multiple,
    # and at least a 2-step grid (when rows allow) so v7x megacore can split it.
    max_rows = max(sublane, MAX_BLOCK_BYTES // (lane * itemsize))
    if rows <= sublane:
        block_rows = rows                      # block == full array, grid of 1
    else:
        half = _round_up(pl.cdiv(rows, 2), sublane)
        block_rows = min(max_rows, half)
    grid = (pl.cdiv(rows, block_rows),)        # ragged last block is masked

    out = pl.pallas_call(
        functools.partial(
            _scaled_leaky_relu_kernel,
            pos_coeff=math.sqrt(2.0),
            neg_coeff=float(negative_slope) * math.sqrt(2.0),
        ),
        out_shape=jax.ShapeDtypeStruct((rows, lane), dtype),
        grid=grid,
        in_specs=[pl.BlockSpec((block_rows, lane), lambda i: (i, 0))],
        out_specs=pl.BlockSpec((block_rows, lane), lambda i: (i, 0)),
        compiler_params=pltpu.CompilerParams(
            dimension_semantics=("parallel",),
            vmem_limit_bytes=VMEM_LIMIT_BYTES,
        ),
        cost_estimate=pl.CostEstimate(
            flops=2 * rows * lane,
            bytes_accessed=2 * rows * lane * itemsize,
            transcendentals=0,
        ),
    )(x2d)

    flat_out = out.reshape(-1)
    if padded:
        flat_out = flat_out[:n]
    return flat_out.reshape(orig_shape)


def _ref(x, negative_slope=0.2):
    return jnp.where(x >= 0, x, negative_slope * x) * math.sqrt(2.0)


if __name__ == "__main__":
    key = jax.random.PRNGKey(0)
    k0, k1, k2 = jax.random.split(key, 3)

    # Small NCHW activation consistent with the module's usage in the GAN
    # (exact-reshape path, single block).
    x_small = jax.random.normal(k0, (2, 4, 16, 16), dtype=jnp.float32)
    y_small = jax.block_until_ready(scaled_leaky_relu(x_small, 0.2))
    assert y_small.shape == x_small.shape and y_small.dtype == x_small.dtype
    assert bool(jnp.max(jnp.abs(y_small - _ref(x_small))) < 1e-5)

    # Medium activation: exercises the multi-step (>=2) grid / ragged last block.
    x_med = jax.random.normal(k1, (2, 64, 32, 32), dtype=jnp.float32)
    y_med = jax.block_until_ready(scaled_leaky_relu(x_med, 0.2))
    assert y_med.shape == x_med.shape and y_med.dtype == x_med.dtype
    assert bool(jnp.max(jnp.abs(y_med - _ref(x_med))) < 1e-5)

    # Ragged size: exercises the pad/slice fallback path.
    x_rag = jax.random.normal(k2, (3, 5, 7), dtype=jnp.float32)
    y_rag = jax.block_until_ready(scaled_leaky_relu(x_rag, 0.2))
    assert y_rag.shape == x_rag.shape and y_rag.dtype == x_rag.dtype
    assert bool(jnp.max(jnp.abs(y_rag - _ref(x_rag))) < 1e-5)

    print("KERNEL_OK")
</pallas_src>

<mosaic_0001>
module attributes {stable_mosaic.version = 11 : i64} {
  func.func @_scaled_leaky_relu_kernel(%arg0: i32, %arg1: memref<4x512xf32, #tpu.memory_space<vmem>>, %arg2: memref<4x512xf32, #tpu.memory_space<vmem>>) attributes {dimension_semantics = [#tpu.dimension_semantics<parallel>], iteration_bounds = array<i64: 1>, scalar_prefetch = 0 : i64, scratch_operands = 0 : i64, tpu.core_type = #tpu.core_type<tc>, window_params = [{transform_indices = @transform_0, window_bounds = array<i64: 4, 512>}, {transform_indices = @transform_1, window_bounds = array<i64: 4, 512>}]} {
    %c0 = arith.constant 0 : index
    %c0_0 = arith.constant 0 : index
    %0 = vector.load %arg1[%c0, %c0_0] : memref<4x512xf32, #tpu.memory_space<vmem>>, vector<4x512xf32>
    %cst = arith.constant 0.000000e+00 : f32
    %1 = vector.broadcast %cst : f32 to vector<4x512xf32>
    %2 = arith.cmpf oge, %0, %1 : vector<4x512xf32>
    %cst_1 = arith.constant 1.41421354 : f32
    %3 = vector.broadcast %cst_1 : f32 to vector<4x512xf32>
    %4 = arith.mulf %0, %3 : vector<4x512xf32>
    %cst_2 = arith.constant 0.282842726 : f32
    %5 = vector.broadcast %cst_2 : f32 to vector<4x512xf32>
    %6 = arith.mulf %0, %5 : vector<4x512xf32>
    %7 = arith.select %2, %4, %6 : vector<4x512xi1>, vector<4x512xf32>
    %c0_3 = arith.constant 0 : index
    %c0_4 = arith.constant 0 : index
    %8 = vector.load %arg2[%c0_3, %c0_4] : memref<4x512xf32, #tpu.memory_space<vmem>>, vector<4x512xf32>
    tpu.vector_store %arg2[%c0_3, %c0_4], %7 {strides = array<i32>} : memref<4x512xf32, #tpu.memory_space<vmem>>, vector<4x512xf32>,
    return
  }
  func.func @transform_0(%arg0: i32) -> (i32, i32) {
    %c0_i32 = arith.constant 0 : i32
    %c0_i32_0 = arith.constant 0 : i32
    return %arg0, %c0_i32 : i32, i32
  }
  func.func @transform_1(%arg0: i32) -> (i32, i32) {
    %c0_i32 = arith.constant 0 : i32
    %c0_i32_0 = arith.constant 0 : i32
    return %arg0, %c0_i32 : i32, i32
  }
}

</mosaic_0001>

<llo_original>
// kernel: tpu_custom_call.1
$region0: #{tpu_custom_call.1}
  #allocation0 [shape = 'u32[]', space=smem, size = 0x4, offset = 0x4, fixed_abs, tag = 'smem constant byte address 0x4 - core index']
  #allocation1 [shape = 'u32[144,128]{1,0:T(1,128)}', space=vmem, size = 0x12000, scoped, tag = 'internal scratch']
  %s0 = inlined_call_operand.hbm [shape: f32[4,512], index: 0, kind: input, shape index: {}]
  %s1 = inlined_call_operand.hbm [shape: f32[4,512], index: 1, kind: output, shape index: {}]
  %s2 = sld [smem:[#allocation0]]
  $region18: #{tpu_custom_call.1} parent=0
    _
  %s4 = ssub.s32 1, %s2
  %s5 = scalar_select 0, %s4, %s2
  $region1: #{tpu_custom_call.1} parent=0
    #allocation2 [shape = 'u8[8192]{0}', space=vmem, size = 0x2000, scoped, tag = 'input window, operand 0, single buffered']
    #allocation3 [shape = 's32[1]{0}', space=sflag, size = 0x4, scoped, tag = 'scoped memory for tpu_custom_call.1']
    #allocation4 [shape = 's32[1]{0}', space=sflag, size = 0x4, scoped, tag = 'scoped memory for tpu_custom_call.1']
    #allocation5 [shape = 'u8[8192]{0}', space=vmem, size = 0x2000, scoped, tag = 'output window, operand 0, single buffered']
    %6 = vsyncpa [#allocation3], 0
    %7 = vsyncpa [#allocation4], 0
    // Predicated region
    $region2: #{tpu_custom_call.1} parent=1 // pred_check
      _
    $region3: #{tpu_custom_call.1} parent=1 // pred_check_branch
      %9 = sbr.rel (0) target = $region5
    $region4: #{tpu_custom_call.1} parent=1 // pred_region
      %s11 = ssub.s32 256, 256
      %12 = vsyncadd [#allocation3], %s11
      %s14 = sshll.u32 [#allocation2], 4
      %s15 = int_to_ptr.vmem [resolvable:$true] %s14
      %17 = dma.hbm_to_vmem [thread:$0]  %s0, 256, %s15, [#allocation3]
    $region5: #{tpu_custom_call.1} parent=1 // pred_fallthru
      _
    // Predicated region
    $region6: #{tpu_custom_call.1} parent=1 // pred_check
      _
    $region7: #{tpu_custom_call.1} parent=1 // pred_check_branch
      %19 = sbr.rel (0) target = $region9
    $region8: #{tpu_custom_call.1} parent=1 // pred_region
      %20 = dma.done [#allocation3], 256
    $region9: #{tpu_custom_call.1} parent=1 // pred_fallthru
      _
    %v21 = vld [vmem:[#allocation2] sm:$0xff]
    %v22 = vld [vmem:[#allocation2 + $0x8] sm:$0xff]
    %vm23 = vcmp.ge.f32.partialorder %v21, 0.0
    %vm24 = vcmp.ge.f32.partialorder %v22, 0.0
    %v25 = vmul.f32 %v21, 1.4142135
    %v26 = vmul.f32 %v22, 1.4142135
    %v27 = vmul.f32 %v21, 0.28284273
    %v28 = vmul.f32 %v22, 0.28284273
    %v29 = vsel %vm23, %v25, %v27
    %v30 = vsel %vm24, %v26, %v28
    %31 = vst [vmem:[#allocation5] sm:$0xff] %v29
    %32 = vst [vmem:[#allocation5 + $0x8] sm:$0xff] %v30
    // Predicated region
    $region10: #{tpu_custom_call.1} parent=1 // pred_check
      _
    $region11: #{tpu_custom_call.1} parent=1 // pred_check_branch
      %34 = sbr.rel (0) target = $region13
    $region12: #{tpu_custom_call.1} parent=1 // pred_region
      %s36 = ssub.s32 256, 256
      %37 = vsyncadd [#allocation4], %s36
      %s39 = sshll.u32 [#allocation5], 4
      %s40 = int_to_ptr.vmem [resolvable:$true] %s39
      %42 = dma.vmem_to_hbm [thread:$0]  %s40, 256, %s1, [#allocation4]
    $region13: #{tpu_custom_call.1} parent=1 // pred_fallthru
      _
    // Predicated region
    $region14: #{tpu_custom_call.1} parent=1 // pred_check
      _
    $region15: #{tpu_custom_call.1} parent=1 // pred_check_branch
      %44 = sbr.rel (0) target = $region17
    $region16: #{tpu_custom_call.1} parent=1 // pred_region
      %45 = dma.done [#allocation4], 256
    $region17: #{tpu_custom_call.1} parent=1 // pred_fallthru
      _
    %46 = vsyncpa [#allocation3], 1
    %47 = vsyncpa [#allocation4], 1

</llo_original>
